<compile_context>
chip_gen: v7x
topology: tpu7x:2x2x1
jax: 0.10.0
libtpu: 0.0.40
codegen_flags: <defaults>
</compile_context>

<pallas_src>
import functools

import jax
import jax.numpy as jnp
from jax.experimental import pallas as pl
from jax.experimental.pallas import tpu as pltpu


def mlp_beta_kernel(x_ref, w1_ref, b1_ref, w2_ref, b2_ref, w3_ref, b3_ref, o_ref):
    # Layer 1: Linear + Tanh (f32 MXU accumulate, tanh on the EUP).
    h = jnp.dot(x_ref[...], w1_ref[...], preferred_element_type=jnp.float32)
    h = jnp.tanh(h + b1_ref[...])
    # Layer 2: Linear + Tanh.
    h = jnp.dot(h, w2_ref[...], preferred_element_type=jnp.float32)
    h = jnp.tanh(h + b2_ref[...])
    # Output layer: Linear (Identity).  Last dim equals the full out_dim (no
    # column padding); store is masked but occupies the same vregs.
    out = jnp.dot(h, w3_ref[...], preferred_element_type=jnp.float32)
    o_ref[...] = (out + b3_ref[...]).astype(o_ref.dtype)


def _round_up(n: int, m: int) -> int:
    return ((n + m - 1) // m) * m


def _cdiv(a: int, b: int) -> int:
    return -(-a // b)


def _vmem_bytes(shape, itemsize=4) -> int:
    """Bytes a buffer of `shape` occupies in VMEM ((8,128)-padded last two dims)."""
    if len(shape) == 1:
        return _round_up(shape[0], 128) * 8 * itemsize
    rows = _round_up(shape[-2], 8)
    cols = _round_up(shape[-1], 128)
    lead = 1
    for d in shape[:-2]:
        lead *= d
    return lead * rows * cols * itemsize


@functools.partial(jax.jit, static_argnames=("block_m",))
def mlp_beta_forward(x, params, *, block_m: int = 2048):
    """x: [batch, obs_dim]; params: dict of w1,b1,w2,b2,w3,b3 ([in,out] / [1,out]).

    Returns [batch, 2*act_dim] float32.
    """
    w1, b1, w2, b2, w3, b3 = (params[k] for k in ("w1", "b1", "w2", "b2", "w3", "b3"))
    batch, obs_dim = x.shape
    h1_dim = w1.shape[1]
    h2_dim, out_dim = w3.shape  # out_dim = 2 * act_dim

    # --- batch tile selection ---------------------------------------------------
    # Bound padding waste (pad only to a multiple of 8 per tile) and, for large
    # batches, produce at least two (an even number of) tiles so v7x's two
    # TensorCores both get work via the "parallel" dimension semantics.
    rb = _round_up(batch, 8)
    if rb >= 512:
        n_tiles = max(2, _cdiv(rb, block_m))
        if n_tiles % 2:
            n_tiles += 1  # even tile count -> balanced across two TCs on v7x
    else:
        n_tiles = 1  # small batch: single exact-size tile, grid=(1,)
    tm = _round_up(_cdiv(rb, n_tiles), 8)
    padded_batch = n_tiles * tm
    if padded_batch != batch:
        x = jnp.pad(x, ((0, padded_batch - batch), (0, 0)))
    grid = (n_tiles,)

    # Weights / biases: constant index_map -> stay VMEM-resident across grid steps.
    const = lambda shape: pl.BlockSpec(shape, lambda i: (0,) * len(shape))

    # --- VMEM budget (lane-padded tiles, double-buffered inputs/outputs) --------
    io_tiles = 2 * (_vmem_bytes((tm, obs_dim)) + _vmem_bytes((tm, out_dim)))
    weight_bytes = 2 * sum(
        _vmem_bytes(a.shape) for a in (w1, b1, w2, b2, w3, b3))
    scratch_bytes = (_vmem_bytes((tm, h1_dim)) + _vmem_bytes((tm, h2_dim))
                     + _vmem_bytes((tm, out_dim)))
    footprint = io_tiles + weight_bytes + scratch_bytes
    vmem_limit = min(max(int(footprint * 1.5), 16 * 1024 * 1024), 64 * 1024 * 1024)

    out = pl.pallas_call(
        mlp_beta_kernel,
        out_shape=jax.ShapeDtypeStruct((padded_batch, out_dim), jnp.float32),
        grid=grid,
        in_specs=[
            pl.BlockSpec((tm, obs_dim), lambda i: (i, 0)),  # x: tiled over batch
            const(w1.shape), const(b1.shape),
            const(w2.shape), const(b2.shape),
            const(w3.shape), const(b3.shape),
        ],
        out_specs=pl.BlockSpec((tm, out_dim), lambda i: (i, 0)),
        compiler_params=pltpu.CompilerParams(
            dimension_semantics=("parallel",),  # shard batch tiles across TCs (v7x)
            vmem_limit_bytes=int(vmem_limit),
        ),
    )(x, w1, b1, w2, b2, w3, b3)

    if padded_batch != batch:
        out = out[:batch]
    return out


def init_params(key, obs_dim, hidden_sizes, act_dim):
    """Deterministic PyTorch-Linear-style init (U[-1/sqrt(fan_in), 1/sqrt(fan_in)])."""
    dims = [obs_dim] + list(hidden_sizes) + [act_dim * 2]
    params = {}
    for i, (fan_in, fan_out) in enumerate(zip(dims[:-1], dims[1:]), start=1):
        key, kw, kb = jax.random.split(key, 3)
        bound = 1.0 / jnp.sqrt(fan_in)
        # Stored as [in, out] (transpose of torch's [out, in]).
        params[f"w{i}"] = jax.random.uniform(
            kw, (fan_in, fan_out), jnp.float32, -bound, bound)
        params[f"b{i}"] = jax.random.uniform(
            kb, (1, fan_out), jnp.float32, -bound, bound)
    return params


def mlp_beta_forward_ref(x, params):
    h = jnp.tanh(x @ params["w1"] + params["b1"])
    h = jnp.tanh(h @ params["w2"] + params["b2"])
    return h @ params["w3"] + params["b3"]


if __name__ == "__main__":
    obs_dim = 16
    hidden_sizes = [32, 32]
    act_dim = 4
    batch = 8

    key = jax.random.PRNGKey(0)
    key, kx = jax.random.split(key)
    x = jax.random.normal(kx, (batch, obs_dim), jnp.float32)
    params = init_params(key, obs_dim, hidden_sizes, act_dim)

    out = mlp_beta_forward(x, params)
    out = jax.block_until_ready(out)

    ref = mlp_beta_forward_ref(x, params)
    assert out.shape == (batch, act_dim * 2), out.shape
    assert jnp.allclose(out, ref, atol=1e-5, rtol=1e-5)

    # Exercise a larger, non-divisible batch (multi-tile grid + row padding path).
    key, kx2 = jax.random.split(key)
    x2 = jax.random.normal(kx2, (2049, obs_dim), jnp.float32)
    out2 = jax.block_until_ready(mlp_beta_forward(x2, params))
    ref2 = mlp_beta_forward_ref(x2, params)
    assert out2.shape == (2049, act_dim * 2), out2.shape
    assert jnp.allclose(out2, ref2, atol=1e-5, rtol=1e-5)

    print("KERNEL_OK")
</pallas_src>

<mosaic_0001>
module attributes {stable_mosaic.version = 11 : i64} {
  func.func @mlp_beta_kernel(%arg0: i32, %arg1: memref<8x16xf32, #tpu.memory_space<vmem>>, %arg2: memref<16x32xf32, #tpu.memory_space<vmem>>, %arg3: memref<1x32xf32, #tpu.memory_space<vmem>>, %arg4: memref<32x32xf32, #tpu.memory_space<vmem>>, %arg5: memref<1x32xf32, #tpu.memory_space<vmem>>, %arg6: memref<32x8xf32, #tpu.memory_space<vmem>>, %arg7: memref<1x8xf32, #tpu.memory_space<vmem>>, %arg8: memref<8x8xf32, #tpu.memory_space<vmem>>) attributes {dimension_semantics = [#tpu.dimension_semantics<parallel>], iteration_bounds = array<i64: 1>, scalar_prefetch = 0 : i64, scratch_operands = 0 : i64, tpu.core_type = #tpu.core_type<tc>, window_params = [{transform_indices = @transform_0, window_bounds = array<i64: 8, 16>}, {pipeline_mode = #tpu.pipeline_mode<synchronous>, transform_indices = @transform_1, window_bounds = array<i64: 16, 32>}, {pipeline_mode = #tpu.pipeline_mode<synchronous>, transform_indices = @transform_2, window_bounds = array<i64: 1, 32>}, {pipeline_mode = #tpu.pipeline_mode<synchronous>, transform_indices = @transform_3, window_bounds = array<i64: 32, 32>}, {pipeline_mode = #tpu.pipeline_mode<synchronous>, transform_indices = @transform_4, window_bounds = array<i64: 1, 32>}, {pipeline_mode = #tpu.pipeline_mode<synchronous>, transform_indices = @transform_5, window_bounds = array<i64: 32, 8>}, {pipeline_mode = #tpu.pipeline_mode<synchronous>, transform_indices = @transform_6, window_bounds = array<i64: 1, 8>}, {transform_indices = @transform_7, window_bounds = array<i64: 8, 8>}]} {
    %c0 = arith.constant 0 : index
    %c0_0 = arith.constant 0 : index
    %0 = vector.load %arg1[%c0, %c0_0] : memref<8x16xf32, #tpu.memory_space<vmem>>, vector<8x16xf32>
    %c0_1 = arith.constant 0 : index
    %c0_2 = arith.constant 0 : index
    %1 = vector.load %arg2[%c0_1, %c0_2] : memref<16x32xf32, #tpu.memory_space<vmem>>, vector<16x32xf32>
    %cst = arith.constant dense<0.000000e+00> : vector<8x32xf32>
    %2 = tpu.matmul %0, %1, %cst {dimension_numbers = #tpu.dot_dimension_numbers<[1], [0], [0], [1], [0, 0, 1, 1], [], []>} : vector<8x16xf32>, vector<16x32xf32>, vector<8x32xf32> -> vector<8x32xf32>
    %c0_3 = arith.constant 0 : index
    %c0_4 = arith.constant 0 : index
    %3 = vector.load %arg3[%c0_3, %c0_4] : memref<1x32xf32, #tpu.memory_space<vmem>>, vector<1x32xf32>
    %4 = vector.broadcast %3 : vector<1x32xf32> to vector<8x32xf32>
    %5 = arith.addf %2, %4 : vector<8x32xf32>
    %6 = math.tanh %5 : vector<8x32xf32>
    %c0_5 = arith.constant 0 : index
    %c0_6 = arith.constant 0 : index
    %7 = vector.load %arg4[%c0_5, %c0_6] : memref<32x32xf32, #tpu.memory_space<vmem>>, vector<32x32xf32>
    %cst_7 = arith.constant dense<0.000000e+00> : vector<8x32xf32>
    %8 = tpu.matmul %6, %7, %cst_7 {dimension_numbers = #tpu.dot_dimension_numbers<[1], [0], [0], [1], [0, 0, 1, 1], [], []>} : vector<8x32xf32>, vector<32x32xf32>, vector<8x32xf32> -> vector<8x32xf32>
    %c0_8 = arith.constant 0 : index
    %c0_9 = arith.constant 0 : index
    %9 = vector.load %arg5[%c0_8, %c0_9] : memref<1x32xf32, #tpu.memory_space<vmem>>, vector<1x32xf32>
    %10 = vector.broadcast %9 : vector<1x32xf32> to vector<8x32xf32>
    %11 = arith.addf %8, %10 : vector<8x32xf32>
    %12 = math.tanh %11 : vector<8x32xf32>
    %c0_10 = arith.constant 0 : index
    %c0_11 = arith.constant 0 : index
    %13 = vector.load %arg6[%c0_10, %c0_11] : memref<32x8xf32, #tpu.memory_space<vmem>>, vector<32x8xf32>
    %cst_12 = arith.constant dense<0.000000e+00> : vector<8x8xf32>
    %14 = tpu.matmul %12, %13, %cst_12 {dimension_numbers = #tpu.dot_dimension_numbers<[1], [0], [0], [1], [0, 0, 1, 1], [], []>} : vector<8x32xf32>, vector<32x8xf32>, vector<8x8xf32> -> vector<8x8xf32>
    %c0_13 = arith.constant 0 : index
    %c0_14 = arith.constant 0 : index
    %15 = vector.load %arg7[%c0_13, %c0_14] : memref<1x8xf32, #tpu.memory_space<vmem>>, vector<1x8xf32>
    %16 = vector.broadcast %15 : vector<1x8xf32> to vector<8x8xf32>
    %17 = arith.addf %14, %16 : vector<8x8xf32>
    %c0_15 = arith.constant 0 : index
    %c0_16 = arith.constant 0 : index
    %18 = vector.load %arg8[%c0_15, %c0_16] : memref<8x8xf32, #tpu.memory_space<vmem>>, vector<8x8xf32>
    tpu.vector_store %arg8[%c0_15, %c0_16], %17 {strides = array<i32>} : memref<8x8xf32, #tpu.memory_space<vmem>>, vector<8x8xf32>,
    return
  }
  func.func @transform_0(%arg0: i32) -> (i32, i32) {
    %c0_i32 = arith.constant 0 : i32
    %c0_i32_0 = arith.constant 0 : i32
    return %arg0, %c0_i32 : i32, i32
  }
  func.func @transform_1(%arg0: i32) -> (i32, i32) {
    %c0_i32 = arith.constant 0 : i32
    %c0_i32_0 = arith.constant 0 : i32
    %c0_i32_1 = arith.constant 0 : i32
    return %c0_i32, %c0_i32_0 : i32, i32
  }
  func.func @transform_2(%arg0: i32) -> (i32, i32) {
    %c0_i32 = arith.constant 0 : i32
    %c0_i32_0 = arith.constant 0 : i32
    %c0_i32_1 = arith.constant 0 : i32
    return %c0_i32, %c0_i32_0 : i32, i32
  }
  func.func @transform_3(%arg0: i32) -> (i32, i32) {
    %c0_i32 = arith.constant 0 : i32
    %c0_i32_0 = arith.constant 0 : i32
    %c0_i32_1 = arith.constant 0 : i32
    return %c0_i32, %c0_i32_0 : i32, i32
  }
  func.func @transform_4(%arg0: i32) -> (i32, i32) {
    %c0_i32 = arith.constant 0 : i32
    %c0_i32_0 = arith.constant 0 : i32
    %c0_i32_1 = arith.constant 0 : i32
    return %c0_i32, %c0_i32_0 : i32, i32
  }
  func.func @transform_5(%arg0: i32) -> (i32, i32) {
    %c0_i32 = arith.constant 0 : i32
    %c0_i32_0 = arith.constant 0 : i32
    %c0_i32_1 = arith.constant 0 : i32
    return %c0_i32, %c0_i32_0 : i32, i32
  }
  func.func @transform_6(%arg0: i32) -> (i32, i32) {
    %c0_i32 = arith.constant 0 : i32
    %c0_i32_0 = arith.constant 0 : i32
    %c0_i32_1 = arith.constant 0 : i32
    return %c0_i32, %c0_i32_0 : i32, i32
  }
  func.func @transform_7(%arg0: i32) -> (i32, i32) {
    %c0_i32 = arith.constant 0 : i32
    %c0_i32_0 = arith.constant 0 : i32
    return %arg0, %c0_i32 : i32, i32
  }
}

</mosaic_0001>

<llo_original>
// kernel: mlp_beta_forward.1
$region0: #{mlp_beta_forward.1}
  #allocation0 [shape = 'u32[]', space=smem, size = 0x4, offset = 0x4, fixed_abs, tag = 'smem constant byte address 0x4 - core index']
  #allocation1 [shape = 'u32[144,128]{1,0:T(1,128)}', space=vmem, size = 0x12000, scoped, tag = 'internal scratch']
  %s0 = inlined_call_operand.hbm [shape: f32[8,16], index: 0, kind: input, shape index: {}]
  %s1 = inlined_call_operand.vmem [shape: f32[16,32], index: 1, kind: input, shape index: {}]
  %s2 = inlined_call_operand.vmem [shape: f32[1,32], index: 2, kind: input, shape index: {}]
  %s3 = inlined_call_operand.vmem [shape: f32[32,32], index: 3, kind: input, shape index: {}]
  %s4 = inlined_call_operand.vmem [shape: f32[1,32], index: 4, kind: input, shape index: {}]
  %s5 = inlined_call_operand.vmem [shape: f32[32,8], index: 5, kind: input, shape index: {}]
  %s6 = inlined_call_operand.vmem [shape: f32[1,8], index: 6, kind: input, shape index: {}]
  %s7 = inlined_call_operand.hbm [shape: f32[8,8], index: 7, kind: output, shape index: {}]
  %s8 = sld [smem:[#allocation0]]
  $region42: #{mlp_beta_forward.1} parent=0
    _
  %s10 = ssub.s32 1, %s8
  %s11 = scalar_select 0, %s10, %s8
  $region1: #{mlp_beta_forward.1} parent=0
    #allocation2 [shape = 'u8[4096]{0}', space=vmem, size = 0x1000, scoped, tag = 'input window, operand 0, single buffered']
    #allocation3 [shape = 's32[1]{0}', space=sflag, size = 0x4, scoped, tag = 'scoped memory for mlp_beta_forward.1']
    #allocation4 [shape = 's32[1]{0}', space=sflag, size = 0x4, scoped, tag = 'scoped memory for mlp_beta_forward.1']
    #allocation5 [shape = 'u8[4096]{0}', space=vmem, size = 0x1000, scoped, tag = 'output window, operand 0, single buffered']
    %12 = vsyncpa [#allocation3], 0
    %13 = vsyncpa [#allocation4], 0
    // Predicated region
    $region2: #{mlp_beta_forward.1} parent=1 // pred_check
      _
    $region3: #{mlp_beta_forward.1} parent=1 // pred_check_branch
      %15 = sbr.rel (0) target = $region5
    $region4: #{mlp_beta_forward.1} parent=1 // pred_region
      %s17 = ssub.s32 128, 128
      %18 = vsyncadd [#allocation3], %s17
      %s20 = sshll.u32 [#allocation2], 4
      %s21 = int_to_ptr.vmem [resolvable:$true] %s20
      %23 = dma.hbm_to_vmem [thread:$0]  %s0, 128, %s21, [#allocation3]
    $region5: #{mlp_beta_forward.1} parent=1 // pred_fallthru
      _
    // Predicated region
    $region6: #{mlp_beta_forward.1} parent=1 // pred_check
      _
    $region7: #{mlp_beta_forward.1} parent=1 // pred_check_branch
      %25 = sbr.rel (0) target = $region9
    $region8: #{mlp_beta_forward.1} parent=1 // pred_region
      _
    $region9: #{mlp_beta_forward.1} parent=1 // pred_fallthru
      _
    // Predicated region
    $region10: #{mlp_beta_forward.1} parent=1 // pred_check
      _
    $region11: #{mlp_beta_forward.1} parent=1 // pred_check_branch
      %27 = sbr.rel (0) target = $region13
    $region12: #{mlp_beta_forward.1} parent=1 // pred_region
      _
    $region13: #{mlp_beta_forward.1} parent=1 // pred_fallthru
      _
    // Predicated region
    $region14: #{mlp_beta_forward.1} parent=1 // pred_check
      _
    $region15: #{mlp_beta_forward.1} parent=1 // pred_check_branch
      %29 = sbr.rel (0) target = $region17
    $region16: #{mlp_beta_forward.1} parent=1 // pred_region
      _
    $region17: #{mlp_beta_forward.1} parent=1 // pred_fallthru
      _
    // Predicated region
    $region18: #{mlp_beta_forward.1} parent=1 // pred_check
      _
    $region19: #{mlp_beta_forward.1} parent=1 // pred_check_branch
      %31 = sbr.rel (0) target = $region21
    $region20: #{mlp_beta_forward.1} parent=1 // pred_region
      _
    $region21: #{mlp_beta_forward.1} parent=1 // pred_fallthru
      _
    // Predicated region
    $region22: #{mlp_beta_forward.1} parent=1 // pred_check
      _
    $region23: #{mlp_beta_forward.1} parent=1 // pred_check_branch
      %33 = sbr.rel (0) target = $region25
    $region24: #{mlp_beta_forward.1} parent=1 // pred_region
      _
    $region25: #{mlp_beta_forward.1} parent=1 // pred_fallthru
      _
    // Predicated region
    $region26: #{mlp_beta_forward.1} parent=1 // pred_check
      _
    $region27: #{mlp_beta_forward.1} parent=1 // pred_check_branch
      %35 = sbr.rel (0) target = $region29
    $region28: #{mlp_beta_forward.1} parent=1 // pred_region
      _
    $region29: #{mlp_beta_forward.1} parent=1 // pred_fallthru
      _
    // Predicated region
    $region30: #{mlp_beta_forward.1} parent=1 // pred_check
      _
    $region31: #{mlp_beta_forward.1} parent=1 // pred_check_branch
      %37 = sbr.rel (0) target = $region33
    $region32: #{mlp_beta_forward.1} parent=1 // pred_region
      %38 = dma.done [#allocation3], 128
    $region33: #{mlp_beta_forward.1} parent=1 // pred_fallthru
      _
    %v39 = vld [vmem:[#allocation2] sm:$0xff]
    %v40 = vld [vmem:[%s1] sm:$0xff]
    %v41 = vld [vmem:[%s1 + $0x8] sm:$0xff]
    %v42 = vld [vmem:[%s2] sm:$0x1]
    %v44 = vlaneseq
    %v45 = vshrl.u32 %v44, 7
    %v46 = vsub.s32 0, %v45
    %v47 = vrot.slane %v42, %v46
    %vm49 = vcmask 130048
    %v51 = vsel %vm49, %v39, 0
    %53 = vmatprep.subr.mxu0 0.0
    %54 = vmatpush1.msra.mxu0 %v40
    %55 = vmatprep.subr.mxu0 0.0
    %56 = vmatpush1.msra.mxu0 %v41
    %57 = vmatprep.subr.mxu0 0.0
    %58 = vmatpush1.msra.mxu0 0.0
    %59 = vmatprep.subr.mxu0 0.0
    %60 = vmatpush1.msra.mxu0 0.0
    %61 = vmatprep.subr.mxu0 0.0
    %62 = vmatpush1.msra.mxu0 0.0
    %63 = vmatprep.subr.mxu0 0.0
    %64 = vmatpush1.msra.mxu0 0.0
    %65 = vmatprep.subr.mxu0 0.0
    %66 = vmatpush1.msra.mxu0 0.0
    %67 = vmatprep.subr.mxu0 0.0
    %68 = vmatpush1.msra.mxu0 0.0
    %69 = vmatprep.subr.mxu0 0.0
    %70 = vmatpush1.msra.mxu0 0.0
    %71 = vmatprep.subr.mxu0 0.0
    %72 = vmatpush1.msra.mxu0 0.0
    %73 = vmatprep.subr.mxu0 0.0
    %74 = vmatpush1.msra.mxu0 0.0
    %75 = vmatprep.subr.mxu0 0.0
    %76 = vmatpush1.msra.mxu0 0.0
    %77 = vmatprep.subr.mxu0 0.0
    %78 = vmatpush1.msra.mxu0 0.0
    %79 = vmatprep.subr.mxu0 0.0
    %80 = vmatpush1.msra.mxu0 0.0
    %81 = vmatprep.subr.mxu0 0.0
    %82 = vmatpush1.msra.mxu0 0.0
    %83 = vmatprep.subr.mxu0 0.0
    %84 = vmatpush1.msra.mxu0 0.0
    %85 = vmatprep.subr.mxu0 0.0
    %86 = vmatpush1.msra.mxu0 0.0
    %87 = vmatprep.subr.mxu0 0.0
    %88 = vmatpush1.msra.mxu0 0.0
    %89 = vmatprep.subr.mxu0 0.0
    %90 = vmatpush1.msra.mxu0 0.0
    %91 = vmatprep.subr.mxu0 0.0
    %92 = vmatpush1.msra.mxu0 0.0
    %93 = vmatprep.subr.mxu0 0.0
    %94 = vmatpush1.msra.mxu0 0.0
    %95 = vmatprep.subr.mxu0 0.0
    %96 = vmatpush1.msra.mxu0 0.0
    %97 = vmatprep.subr.mxu0 0.0
    %98 = vmatpush1.msra.mxu0 0.0
    %99 = vmatprep.subr.mxu0 0.0
    %100 = vmatpush1.msra.mxu0 0.0
    %101 = vmatprep.subr.mxu0 0.0
    %102 = vmatpush1.msra.mxu0 0.0
    %103 = vmatprep.subr.mxu0 0.0
    %104 = vmatpush1.msra.mxu0 0.0
    %105 = vmatprep.subr.mxu0 0.0
    %106 = vmatpush1.msra.mxu0 0.0
    %107 = vmatprep.subr.mxu0 0.0
    %108 = vmatpush1.msra.mxu0 0.0
    %109 = vmatprep.subr.mxu0 0.0
    %110 = vmatpush1.msra.mxu0 0.0
    %111 = vmatprep.subr.mxu0 0.0
    %112 = vmatpush1.msra.mxu0 0.0
    %113 = vmatprep.subr.mxu0 0.0
    %114 = vmatpush1.msra.mxu0 0.0
    %115 = vmatprep.subr.mxu0 0.0
    %116 = vmatpush1.msra.mxu0 0.0
    %117 = vmatprep.mubr.f32.mxu0 0.0
    %118 = vmatmul.mubr.f32.gmra.mrb[0].mxu0 %v51
    %v119 = vpop.f32.mrb[0].mxu0
    %v120 = vadd.f32 %v47, %v119
    %v121 = vpop.f32.mrb[0].mxu0
    %122 = vdwg.mxu0
    %v123 = vtanh.pop %v120
    %v124 = vld [vmem:[%s3] sm:$0xff]
    %v125 = vld [vmem:[%s3 + $0x8] sm:$0xff]
    %v126 = vld [vmem:[%s3 + $0x10] sm:$0xff]
    %v127 = vld [vmem:[%s3 + $0x18] sm:$0xff]
    %v128 = vld [vmem:[%s4] sm:$0x1]
    %v130 = vlaneseq
    %v131 = vshrl.u32 %v130, 7
    %v132 = vsub.s32 0, %v131
    %v133 = vrot.slane %v128, %v132
    %vm135 = vcmask 261120
    %v137 = vsel %vm135, %v123, 0
    %139 = vmatprep.subr.mxu0 0.0
    %140 = vmatpush1.msra.mxu0 %v124
    %141 = vmatprep.subr.mxu0 0.0
    %142 = vmatpush1.msra.mxu0 %v125
    %143 = vmatprep.subr.mxu0 0.0
    %144 = vmatpush1.msra.mxu0 %v126
    %145 = vmatprep.subr.mxu0 0.0
    %146 = vmatpush1.msra.mxu0 %v127
    %147 = vmatprep.subr.mxu0 0.0
    %148 = vmatpush1.msra.mxu0 0.0
    %149 = vmatprep.subr.mxu0 0.0
    %150 = vmatpush1.msra.mxu0 0.0
    %151 = vmatprep.subr.mxu0 0.0
    %152 = vmatpush1.msra.mxu0 0.0
    %153 = vmatprep.subr.mxu0 0.0
    %154 = vmatpush1.msra.mxu0 0.0
    %155 = vmatprep.subr.mxu0 0.0
    %156 = vmatpush1.msra.mxu0 0.0
    %157 = vmatprep.subr.mxu0 0.0
    %158 = vmatpush1.msra.mxu0 0.0
    %159 = vmatprep.subr.mxu0 0.0
    %160 = vmatpush1.msra.mxu0 0.0
    %161 = vmatprep.subr.mxu0 0.0
    %162 = vmatpush1.msra.mxu0 0.0
    %163 = vmatprep.subr.mxu0 0.0
    %164 = vmatpush1.msra.mxu0 0.0
    %165 = vmatprep.subr.mxu0 0.0
    %166 = vmatpush1.msra.mxu0 0.0
    %167 = vmatprep.subr.mxu0 0.0
    %168 = vmatpush1.msra.mxu0 0.0
    %169 = vmatprep.subr.mxu0 0.0
    %170 = vmatpush1.msra.mxu0 0.0
    %171 = vmatprep.subr.mxu0 0.0
    %172 = vmatpush1.msra.mxu0 0.0
    %173 = vmatprep.subr.mxu0 0.0
    %174 = vmatpush1.msra.mxu0 0.0
    %175 = vmatprep.subr.mxu0 0.0
    %176 = vmatpush1.msra.mxu0 0.0
    %177 = vmatprep.subr.mxu0 0.0
    %178 = vmatpush1.msra.mxu0 0.0
    %179 = vmatprep.subr.mxu0 0.0
    %180 = vmatpush1.msra.mxu0 0.0
    %181 = vmatprep.subr.mxu0 0.0
    %182 = vmatpush1.msra.mxu0 0.0
    %183 = vmatprep.subr.mxu0 0.0
    %184 = vmatpush1.msra.mxu0 0.0
    %185 = vmatprep.subr.mxu0 0.0
    %186 = vmatpush1.msra.mxu0 0.0
    %187 = vmatprep.subr.mxu0 0.0
    %188 = vmatpush1.msra.mxu0 0.0
    %189 = vmatprep.subr.mxu0 0.0
    %190 = vmatpush1.msra.mxu0 0.0
    %191 = vmatprep.subr.mxu0 0.0
    %192 = vmatpush1.msra.mxu0 0.0
    %193 = vmatprep.subr.mxu0 0.0
    %194 = vmatpush1.msra.mxu0 0.0
    %195 = vmatprep.subr.mxu0 0.0
    %196 = vmatpush1.msra.mxu0 0.0
    %197 = vmatprep.subr.mxu0 0.0
    %198 = vmatpush1.msra.mxu0 0.0
    %199 = vmatprep.subr.mxu0 0.0
    %200 = vmatpush1.msra.mxu0 0.0
    %201 = vmatprep.subr.mxu0 0.0
    %202 = vmatpush1.msra.mxu0 0.0
    %203 = vmatprep.mubr.f32.mxu0 0.0
    %204 = vmatmul.mubr.f32.gmra.mrb[0].mxu0 %v137
    %v205 = vpop.f32.mrb[0].mxu0
    %v206 = vadd.f32 %v133, %v205
    %v207 = vpop.f32.mrb[0].mxu0
    %208 = vdwg.mxu0
    %v209 = vtanh.pop %v206
    %v210 = vld [vmem:[%s5] sm:$0xff]
    %v211 = vld [vmem:[%s5 + $0x8] sm:$0xff]
    %v212 = vld [vmem:[%s5 + $0x10] sm:$0xff]
    %v213 = vld [vmem:[%s5 + $0x18] sm:$0xff]
    %v214 = vld [vmem:[%s6] sm:$0x1]
    %v216 = vlaneseq
    %v217 = vshrl.u32 %v216, 7
    %v218 = vsub.s32 0, %v217
    %v219 = vrot.slane %v214, %v218
    %v222 = vsel %vm135, %v209, 0
    %224 = vmatprep.subr.mxu0 0.0
    %225 = vmatpush1.msra.mxu0 %v210
    %226 = vmatprep.subr.mxu0 0.0
    %227 = vmatpush1.msra.mxu0 %v211
    %228 = vmatprep.subr.mxu0 0.0
    %229 = vmatpush1.msra.mxu0 %v212
    %230 = vmatprep.subr.mxu0 0.0
    %231 = vmatpush1.msra.mxu0 %v213
    %232 = vmatprep.subr.mxu0 0.0
    %233 = vmatpush1.msra.mxu0 0.0
    %234 = vmatprep.subr.mxu0 0.0
    %235 = vmatpush1.msra.mxu0 0.0
    %236 = vmatprep.subr.mxu0 0.0
    %237 = vmatpush1.msra.mxu0 0.0
    %238 = vmatprep.subr.mxu0 0.0
    %239 = vmatpush1.msra.mxu0 0.0
    %240 = vmatprep.subr.mxu0 0.0
    %241 = vmatpush1.msra.mxu0 0.0
    %242 = vmatprep.subr.mxu0 0.0
    %243 = vmatpush1.msra.mxu0 0.0
    %244 = vmatprep.subr.mxu0 0.0
    %245 = vmatpush1.msra.mxu0 0.0
    %246 = vmatprep.subr.mxu0 0.0
    %247 = vmatpush1.msra.mxu0 0.0
    %248 = vmatprep.subr.mxu0 0.0
    %249 = vmatpush1.msra.mxu0 0.0
    %250 = vmatprep.subr.mxu0 0.0
    %251 = vmatpush1.msra.mxu0 0.0
    %252 = vmatprep.subr.mxu0 0.0
    %253 = vmatpush1.msra.mxu0 0.0
    %254 = vmatprep.subr.mxu0 0.0
    %255 = vmatpush1.msra.mxu0 0.0
    %256 = vmatprep.subr.mxu0 0.0
    %257 = vmatpush1.msra.mxu0 0.0
    %258 = vmatprep.subr.mxu0 0.0
    %259 = vmatpush1.msra.mxu0 0.0
    %260 = vmatprep.subr.mxu0 0.0
    %261 = vmatpush1.msra.mxu0 0.0
    %262 = vmatprep.subr.mxu0 0.0
    %263 = vmatpush1.msra.mxu0 0.0
    %264 = vmatprep.subr.mxu0 0.0
    %265 = vmatpush1.msra.mxu0 0.0
    %266 = vmatprep.subr.mxu0 0.0
    %267 = vmatpush1.msra.mxu0 0.0
    %268 = vmatprep.subr.mxu0 0.0
    %269 = vmatpush1.msra.mxu0 0.0
    %270 = vmatprep.subr.mxu0 0.0
    %271 = vmatpush1.msra.mxu0 0.0
    %272 = vmatprep.subr.mxu0 0.0
    %273 = vmatpush1.msra.mxu0 0.0
    %274 = vmatprep.subr.mxu0 0.0
    %275 = vmatpush1.msra.mxu0 0.0
    %276 = vmatprep.subr.mxu0 0.0
    %277 = vmatpush1.msra.mxu0 0.0
    %278 = vmatprep.subr.mxu0 0.0
    %279 = vmatpush1.msra.mxu0 0.0
    %280 = vmatprep.subr.mxu0 0.0
    %281 = vmatpush1.msra.mxu0 0.0
    %282 = vmatprep.subr.mxu0 0.0
    %283 = vmatpush1.msra.mxu0 0.0
    %284 = vmatprep.subr.mxu0 0.0
    %285 = vmatpush1.msra.mxu0 0.0
    %286 = vmatprep.subr.mxu0 0.0
    %287 = vmatpush1.msra.mxu0 0.0
    %288 = vmatprep.mubr.f32.mxu0 0.0
    %289 = vmatmul.mubr.f32.gmra.mrb[0].mxu0 %v222
    %v290 = vpop.f32.mrb[0].mxu0
    %v291 = vadd.f32 %v219, %v290
    %v292 = vpop.f32.mrb[0].mxu0
    %293 = vdwg.mxu0
    %vm294 = vcmask 64512
    %295 = vst.msk [vmem:[#allocation5] sm:$0xff] %vm294, %v291
    // Predicated region
    $region34: #{mlp_beta_forward.1} parent=1 // pred_check
      _
    $region35: #{mlp_beta_forward.1} parent=1 // pred_check_branch
      %297 = sbr.rel (0) target = $region37
    $region36: #{mlp_beta_forward.1} parent=1 // pred_region
      %s299 = ssub.s32 128, 128
      %300 = vsyncadd [#allocation4], %s299
      %s302 = sshll.u32 [#allocation5], 4
      %s303 = int_to_ptr.vmem [resolvable:$true] %s302
      %305 = dma.vmem_to_hbm [thread:$0]  %s303, 128, %s7, [#allocation4]
    $region37: #{mlp_beta_forward.1} parent=1 // pred_fallthru
      _
    // Predicated region
    $region38: #{mlp_beta_forward.1} parent=1 // pred_check
      _
    $region39: #{mlp_beta_forward.1} parent=1 // pred_check_branch
      %307 = sbr.rel (0) target = $region41
    $region40: #{mlp_beta_forward.1} parent=1 // pred_region
      %308 = dma.done [#allocation4], 128
    $region41: #{mlp_beta_forward.1} parent=1 // pred_fallthru
      _
    %309 = vsyncpa [#allocation3], 1
    %310 = vsyncpa [#allocation4], 1

</llo_original>
